<compile_context>
chip_gen: v7x
topology: tpu7x:2x2x1
jax: 0.10.0
libtpu: 0.0.40
codegen_flags: <defaults>
</compile_context>

<pallas_src>
import functools

import jax
import jax.numpy as jnp
from jax.experimental import pallas as pl
from jax.experimental.pallas import tpu as pltpu


def _complex_linear_kernel(x_ref, w_ref, b_ref, o_ref, acc_ref):
    """One grid step of the fused complex linear.

    x_ref:   (tm, K)   channel-half tile of x (k=0 -> x_r, k=1 -> x_i)
    w_ref:   (K, tn)   matching half of the packed weight (2, K, 2N)
    b_ref:   (1, tn)   folded bias [b_r - b_i | b_r + b_i]
    o_ref:   (tm, tn)  output tile of the (B, C, 2N) result
    acc_ref: (tm, tn)  f32 accumulator scratch (lives across the k axis)
    """
    k = pl.program_id(3)

    @pl.when(k == 0)
    def _init():
        acc_ref[...] = jnp.zeros_like(acc_ref)

    acc_ref[...] += jnp.dot(x_ref[...], w_ref[...],
                            preferred_element_type=jnp.float32)

    @pl.when(k == pl.num_programs(3) - 1)
    def _finalize():
        o_ref[...] = (acc_ref[...] +
                      b_ref[...].astype(jnp.float32)).astype(o_ref.dtype)


def _pick_tile(dim, preferred, align):
    """Largest multiple of `align` <= `preferred` that divides `dim`;
    falls back to the full dimension (full-extent blocks are always legal)."""
    t = (min(preferred, dim) // align) * align
    while t >= align:
        if dim % t == 0:
            return t
        t -= align
    return dim


@functools.partial(jax.jit, static_argnames=("tm", "tn"))
def complex_linear_pallas(x, w_r, b_r, w_i, b_i, *, tm=None, tn=None):
    """x: (B, 2*C, K); w_*: (N, K); b_*: (N,)  ->  (B, C, 2*N)."""
    B, twoC, K = x.shape
    C = twoC // 2
    N = w_r.shape[0]
    twoN = 2 * N

    if tm is None:
        tm = _pick_tile(C, 256, 8)        # sublane-aligned M tile over channels
    if tn is None:
        tn = _pick_tile(twoN, 512, 128)   # lane-dense N tile over 2*out_features

    # Free, contiguous reshape: (B, 2C, K) -> (B, 2, C, K). The kernel's
    # index_map picks the real/imag half, so x makes exactly one HBM pass.
    x4 = x.reshape(B, 2, C, K)

    # Packed weight (2, K, 2N):
    #   half 0 (multiplies x_r): [ Wr^T |  Wi^T ]
    #   half 1 (multiplies x_i): [-Wi^T |  Wr^T ]
    # For static model weights this should be built once at init, not per call.
    wr_t = w_r.T
    wi_t = w_i.T
    w_cat = jnp.stack(
        (jnp.concatenate((wr_t, wi_t), axis=1),
         jnp.concatenate((-wi_t, wr_t), axis=1)),
        axis=0)
    # Folded bias, added once per output tile at finalize.
    b_cat = jnp.concatenate((b_r - b_i, b_r + b_i)).reshape(1, twoN)

    grid = (B, C // tm, twoN // tn, 2)

    out = pl.pallas_call(
        _complex_linear_kernel,
        out_shape=jax.ShapeDtypeStruct((B, C, twoN), x.dtype),
        grid_spec=pltpu.PrefetchScalarGridSpec(
            num_scalar_prefetch=0,
            grid=grid,
            in_specs=[
                # x: batch b, channel-half k, M tile i (leading dims squeezed).
                pl.BlockSpec((None, None, tm, K),
                             lambda b, i, j, k: (b, k, i, 0)),
                # packed weight: half k, N tile j (independent of b and i).
                pl.BlockSpec((None, K, tn),
                             lambda b, i, j, k: (k, 0, j)),
                # folded bias: N tile j only.
                pl.BlockSpec((1, tn), lambda b, i, j, k: (0, j)),
            ],
            out_specs=pl.BlockSpec((None, tm, tn),
                                   lambda b, i, j, k: (b, i, j)),
            scratch_shapes=[pltpu.VMEM((tm, tn), jnp.float32)],
        ),
        compiler_params=pltpu.CompilerParams(
            dimension_semantics=("parallel", "parallel", "parallel",
                                 "arbitrary"),
            vmem_limit_bytes=48 << 20,
        ),
    )(x4, w_cat, b_cat)

    return out


def _init_linear_params(key, in_features, out_features):
    # Deterministic, matching nn.Linear's default U(-1/sqrt(in), 1/sqrt(in)).
    kw, kb = jax.random.split(key)
    bound = 1.0 / jnp.sqrt(jnp.float32(in_features))
    w = jax.random.uniform(kw, (out_features, in_features), jnp.float32,
                           minval=-bound, maxval=bound)
    b = jax.random.uniform(kb, (out_features,), jnp.float32,
                           minval=-bound, maxval=bound)
    return w, b


if __name__ == "__main__":
    key = jax.random.PRNGKey(0)
    k_x, k_r, k_i = jax.random.split(key, 3)

    B, C, in_features, out_features = 2, 4, 32, 32
    x = jax.random.normal(k_x, (B, 2 * C, in_features), jnp.float32)

    w_r, b_r = _init_linear_params(k_r, in_features, out_features)
    w_i, b_i = _init_linear_params(k_i, in_features, out_features)

    out = complex_linear_pallas(x, w_r, b_r, w_i, b_i)
    out = jax.block_until_ready(out)

    # Pure-JAX reference (mirrors the PyTorch forward).
    x_r, x_i = x[:, :C, :], x[:, C:, :]
    fr = lambda t: t @ w_r.T + b_r
    fi = lambda t: t @ w_i.T + b_i
    ref = jnp.concatenate((fr(x_r) - fi(x_i), fr(x_i) + fi(x_r)), axis=-1)

    assert out.shape == (B, C, 2 * out_features), out.shape
    assert jnp.allclose(out, ref, atol=1e-4, rtol=1e-4), \
        float(jnp.max(jnp.abs(out - ref)))

    print("KERNEL_OK")
</pallas_src>

<mosaic_0001>
module attributes {stable_mosaic.version = 11 : i64} {
  func.func @_complex_linear_kernel(%arg0: i32, %arg1: i32, %arg2: i32, %arg3: i32, %arg4: memref<1x1x4x32xf32, #tpu.memory_space<vmem>>, %arg5: memref<1x32x64xf32, #tpu.memory_space<vmem>>, %arg6: memref<1x64xf32, #tpu.memory_space<vmem>>, %arg7: memref<1x4x64xf32, #tpu.memory_space<vmem>>, %arg8: memref<4x64xf32, #tpu.memory_space<vmem>>) attributes {dimension_semantics = [#tpu.dimension_semantics<parallel>, #tpu.dimension_semantics<parallel>, #tpu.dimension_semantics<parallel>, #tpu.dimension_semantics<arbitrary>], iteration_bounds = array<i64: 2, 1, 1, 2>, scalar_prefetch = 0 : i64, scratch_operands = 1 : i64, tpu.core_type = #tpu.core_type<tc>, window_params = [{transform_indices = @transform_0, window_bounds = array<i64: 1, 1, 4, 32>}, {transform_indices = @transform_1, window_bounds = array<i64: 1, 32, 64>}, {transform_indices = @transform_2, window_bounds = array<i64: 1, 64>}, {transform_indices = @transform_3, window_bounds = array<i64: 1, 4, 64>}]} {
    %c0_i32 = arith.constant 0 : i32
    %0 = arith.cmpi eq, %arg3, %c0_i32 : i32
    %1 = arith.extui %0 : i1 to i32
    %c0_i32_0 = arith.constant 0 : i32
    %2 = arith.cmpi ne, %1, %c0_i32_0 : i32
    scf.if %2 {
      %cst_12 = arith.constant 0.000000e+00 : f32
      %14 = vector.broadcast %cst_12 : f32 to vector<4x64xf32>
      %c0_13 = arith.constant 0 : index
      %c0_14 = arith.constant 0 : index
      %15 = vector.load %arg8[%c0_13, %c0_14] : memref<4x64xf32, #tpu.memory_space<vmem>>, vector<4x64xf32>
      tpu.vector_store %arg8[%c0_13, %c0_14], %14 {strides = array<i32>} : memref<4x64xf32, #tpu.memory_space<vmem>>, vector<4x64xf32>,
    } else {
    }
    %c0 = arith.constant 0 : index
    %c0_1 = arith.constant 0 : index
    %3 = vector.load %arg8[%c0, %c0_1] : memref<4x64xf32, #tpu.memory_space<vmem>>, vector<4x64xf32>
    %c0_2 = arith.constant 0 : index
    %c0_3 = arith.constant 0 : index
    %c0_4 = arith.constant 0 : index
    %c0_5 = arith.constant 0 : index
    %4 = vector.load %arg4[%c0_2, %c0_3, %c0_4, %c0_5] : memref<1x1x4x32xf32, #tpu.memory_space<vmem>>, vector<1x1x4x32xf32>
    %5 = vector.shape_cast %4 : vector<1x1x4x32xf32> to vector<4x32xf32>
    %c0_6 = arith.constant 0 : index
    %c0_7 = arith.constant 0 : index
    %c0_8 = arith.constant 0 : index
    %6 = vector.load %arg5[%c0_6, %c0_7, %c0_8] : memref<1x32x64xf32, #tpu.memory_space<vmem>>, vector<1x32x64xf32>
    %7 = vector.shape_cast %6 : vector<1x32x64xf32> to vector<32x64xf32>
    %cst = arith.constant dense<0.000000e+00> : vector<4x64xf32>
    %8 = tpu.matmul %5, %7, %cst {dimension_numbers = #tpu.dot_dimension_numbers<[1], [0], [0], [1], [0, 0, 1, 1], [], []>} : vector<4x32xf32>, vector<32x64xf32>, vector<4x64xf32> -> vector<4x64xf32>
    %9 = arith.addf %3, %8 : vector<4x64xf32>
    %c0_9 = arith.constant 0 : index
    %c0_10 = arith.constant 0 : index
    %10 = vector.load %arg8[%c0_9, %c0_10] : memref<4x64xf32, #tpu.memory_space<vmem>>, vector<4x64xf32>
    tpu.vector_store %arg8[%c0_9, %c0_10], %9 {strides = array<i32>} : memref<4x64xf32, #tpu.memory_space<vmem>>, vector<4x64xf32>,
    %c1_i32 = arith.constant 1 : i32
    %11 = arith.cmpi eq, %arg3, %c1_i32 : i32
    %12 = arith.extui %11 : i1 to i32
    %c0_i32_11 = arith.constant 0 : i32
    %13 = arith.cmpi ne, %12, %c0_i32_11 : i32
    scf.if %13 {
      %c0_12 = arith.constant 0 : index
      %c0_13 = arith.constant 0 : index
      %14 = vector.load %arg8[%c0_12, %c0_13] : memref<4x64xf32, #tpu.memory_space<vmem>>, vector<4x64xf32>
      %c0_14 = arith.constant 0 : index
      %c0_15 = arith.constant 0 : index
      %15 = vector.load %arg6[%c0_14, %c0_15] : memref<1x64xf32, #tpu.memory_space<vmem>>, vector<1x64xf32>
      %16 = vector.broadcast %15 : vector<1x64xf32> to vector<4x64xf32>
      %17 = arith.addf %14, %16 : vector<4x64xf32>
      %c0_16 = arith.constant 0 : index
      %c0_17 = arith.constant 0 : index
      %c0_18 = arith.constant 0 : index
      %18 = vector.load %arg7[%c0_16, %c0_17, %c0_18] : memref<1x4x64xf32, #tpu.memory_space<vmem>>, vector<1x4x64xf32>
      %19 = vector.shape_cast %18 : vector<1x4x64xf32> to vector<4x64xf32>
      %20 = vector.shape_cast %17 : vector<4x64xf32> to vector<1x4x64xf32>
      tpu.vector_store %arg7[%c0_16, %c0_17, %c0_18], %20 {strides = array<i32>} : memref<1x4x64xf32, #tpu.memory_space<vmem>>, vector<1x4x64xf32>,
    } else {
    }
    return
  }
  func.func @transform_0(%arg0: i32, %arg1: i32, %arg2: i32, %arg3: i32) -> (i32, i32, i32, i32) {
    %c0_i32 = arith.constant 0 : i32
    %c0_i32_0 = arith.constant 0 : i32
    return %arg0, %arg3, %arg1, %c0_i32 : i32, i32, i32, i32
  }
  func.func @transform_1(%arg0: i32, %arg1: i32, %arg2: i32, %arg3: i32) -> (i32, i32, i32) {
    %c0_i32 = arith.constant 0 : i32
    %c0_i32_0 = arith.constant 0 : i32
    return %arg3, %c0_i32, %arg2 : i32, i32, i32
  }
  func.func @transform_2(%arg0: i32, %arg1: i32, %arg2: i32, %arg3: i32) -> (i32, i32) {
    %c0_i32 = arith.constant 0 : i32
    %c0_i32_0 = arith.constant 0 : i32
    return %c0_i32, %arg2 : i32, i32
  }
  func.func @transform_3(%arg0: i32, %arg1: i32, %arg2: i32, %arg3: i32) -> (i32, i32, i32) {
    %c0_i32 = arith.constant 0 : i32
    return %arg0, %arg1, %arg2 : i32, i32, i32
  }
}

</mosaic_0001>

<llo_original>
// kernel: complex_linear_pallas.1
$region0: #{complex_linear_pallas.1}
  #allocation0 [shape = 'u32[]', space=smem, size = 0x4, offset = 0x4, fixed_abs, tag = 'smem constant byte address 0x4 - core index']
  #allocation1 [shape = 'u32[144,128]{1,0:T(1,128)}', space=vmem, size = 0x12000, scoped, tag = 'internal scratch']
  #allocation2 [shape = 'f32[4,64]{1,0:T(4,128)}', space=vmem, size = 0x800, scoped, tag = 'scratch operand']
  %s0 = inlined_call_operand.vmem [shape: f32[2,2,4,32], index: 0, kind: input, shape index: {}]
  %s1 = inlined_call_operand.vmem [shape: f32[2,32,64], index: 1, kind: input, shape index: {}]
  %s2 = inlined_call_operand.vmem [shape: f32[1,64], index: 2, kind: input, shape index: {}]
  %s3 = inlined_call_operand.hbm [shape: f32[2,4,64], index: 3, kind: output, shape index: {}]
  %s4 = sld [smem:[#allocation0]]
  $region53: #{complex_linear_pallas.1} parent=0
    _
  %s6 = ssub.s32 1, %s4
  %s7 = scalar_select 0, %s6, %s4
  $region1: #{complex_linear_pallas.1} parent=0
    #allocation3 [shape = 'u8[4096]{0}', space=vmem, size = 0x1000, scoped, tag = 'output window, operand 0']
    #allocation4 [shape = 's32[2]{0}', space=sflag, size = 0x8, scoped, tag = 'scoped memory for complex_linear_pallas.1']
    %8 = vsyncpa [#allocation4], 0
    %s9 = scalar_lea.sflag [#allocation4], 1
    %10 = vsyncpa %s9, 0
    loop: start=0, step=1, limit=6
    $region2: #{complex_linear_pallas.1} parent=1 // loop_pre_header
      _
    $region3: #{complex_linear_pallas.1} parent=1 // loop_header
      %s12 = sphi 0, %s16
      %p13 = scmp.ge.s32.totalorder %s12, 6
      %s19 = sphi 0, %s45
      %s20 = sphi 0, %s41
      %s21 = sphi 0, %s37
      %s22 = sphi 0, %s33
      %s23 = sphi 0, %s19
      %s24 = sphi 0, %s20
      %s25 = sphi 0, %s21
      %s26 = sphi 0, %s22
      %s27 = sphi 0, %s23
      %s28 = sphi 0, %s24
      %s29 = sphi 0, %s25
      %s30 = sphi 0, %s26
      %s52 = sphi 0, %s54
      %s55 = sphi 0, %s52
      %s56 = sphi 0, %s55
      %s72 = sphi 0, %s56
      %s80 = sphi 0, %s82
      %s83 = sphi 0, %s80
      %s84 = sphi 0, %s83
      %s100 = sphi 0, %s84
      %s106 = sphi 0, %s108
      %s109 = sphi 0, %s106
      %s110 = sphi 0, %s109
      %s126 = sphi 0, %s110
      %s136 = sphi 0, %s138
      %s139 = sphi 0, %s136
      %s140 = sphi 0, %s139
      %s156 = sphi 0, %s140
    $region4: #{complex_linear_pallas.1} parent=1 // loop_header_branch
      %15 = sbr.rel (%p13) target = $region8
    $region5: #{complex_linear_pallas.1} parent=1 // loop_body
      %s17 = ssub.s32 %s12, 1
      %s18 = ssub.s32 %s12, 2
      %s31 = sadd.s32 1, %s22
      %p32 = scmp.ge.s32.totalorder %s31, 2
      %s33 = scalar_select %p32, 0, %s31
      %s34 = sadd.s32 1, %s21
      %s35 = scalar_select %p32, %s34, %s21
      %p36 = scmp.ge.s32.totalorder %s35, 1
      %s37 = scalar_select %p36, 0, %s35
      %s38 = sadd.s32 1, %s20
      %s39 = scalar_select %p36, %s38, %s20
      %p40 = scmp.ge.s32.totalorder %s39, 1
      %s41 = scalar_select %p40, 0, %s39
      %s42 = sadd.s32 1, %s19
      %s43 = scalar_select %p40, %s42, %s19
      %p44 = scmp.ge.s32.totalorder %s43, 2
      %s45 = scalar_select %p44, 0, %s43
      %s46 = ssub.s32 %s19, %s45
      %s47 = ssub.s32 %s22, %s33
      %s48 = sor.u32 %s46, %s47
      %s49 = ssub.s32 %s20, %s41
      %s50 = sor.u32 %s48, %s49
      %p51 = scmp.eq.s32.totalorder %s50, 0
      %s53 = sadd.s32 %s52, 1
      %s54 = scalar_select %p51, %s52, %s53
      %p57 = pneg %p51
      %p58 = scmp.eq.s32.totalorder %s12, 3
      %p59 = por %p57, %p58
      %p60 = scmp.ne.s32.totalorder %s52, %s55
      %p61 = scmp.eq.s32.totalorder %s12, 0
      %p62 = por %p60, %p61
      %p63 = scmp.ne.s32.totalorder %s52, %s55
      %p64 = scmp.eq.s32.totalorder %s17, 3
      %p65 = por %p63, %p64
      %p66 = scmp.ne.s32.totalorder %s55, %s56
      %p67 = scmp.eq.s32.totalorder %s17, 0
      %p68 = por %p66, %p67
      %p69 = scmp.ne.s32.totalorder %s55, %s56
      %p70 = scmp.eq.s32.totalorder %s18, 3
      %p71 = por %p69, %p70
      %p73 = scmp.ne.s32.totalorder %s56, %s72
      %p74 = scmp.eq.s32.totalorder %s18, 0
      %p75 = por %p73, %p74
      %s76 = ssub.s32 %s22, %s33
      %s77 = ssub.s32 %s21, %s37
      %s78 = sor.u32 %s76, %s77
      %p79 = scmp.eq.s32.totalorder %s78, 0
      %s81 = sadd.s32 %s80, 1
      %s82 = scalar_select %p79, %s80, %s81
      %p85 = pneg %p79
      %p86 = scmp.eq.s32.totalorder %s12, 3
      %p87 = por %p85, %p86
      %p88 = scmp.ne.s32.totalorder %s80, %s83
      %p89 = scmp.eq.s32.totalorder %s12, 0
      %p90 = por %p88, %p89
      %p91 = scmp.ne.s32.totalorder %s80, %s83
      %p92 = scmp.eq.s32.totalorder %s17, 3
      %p93 = por %p91, %p92
      %p94 = scmp.ne.s32.totalorder %s83, %s84
      %p95 = scmp.eq.s32.totalorder %s17, 0
      %p96 = por %p94, %p95
      %p97 = scmp.ne.s32.totalorder %s83, %s84
      %p98 = scmp.eq.s32.totalorder %s18, 3
      %p99 = por %p97, %p98
      %p101 = scmp.ne.s32.totalorder %s84, %s100
      %p102 = scmp.eq.s32.totalorder %s18, 0
      %p103 = por %p101, %p102
      %s104 = ssub.s32 %s21, %s37
      %p105 = scmp.eq.s32.totalorder %s104, 0
      %s107 = sadd.s32 %s106, 1
      %s108 = scalar_select %p105, %s106, %s107
      %p111 = pneg %p105
      %p112 = scmp.eq.s32.totalorder %s12, 3
      %p113 = por %p111, %p112
      %p114 = scmp.ne.s32.totalorder %s106, %s109
      %p115 = scmp.eq.s32.totalorder %s12, 0
      %p116 = por %p114, %p115
      %p117 = scmp.ne.s32.totalorder %s106, %s109
      %p118 = scmp.eq.s32.totalorder %s17, 3
      %p119 = por %p117, %p118
      %p120 = scmp.ne.s32.totalorder %s109, %s110
      %p121 = scmp.eq.s32.totalorder %s17, 0
      %p122 = por %p120, %p121
      %p123 = scmp.ne.s32.totalorder %s109, %s110
      %p124 = scmp.eq.s32.totalorder %s18, 3
      %p125 = por %p123, %p124
      %p127 = scmp.ne.s32.totalorder %s110, %s126
      %p128 = scmp.eq.s32.totalorder %s18, 0
      %p129 = por %p127, %p128
      %s130 = ssub.s32 %s19, %s45
      %s131 = ssub.s32 %s20, %s41
      %s132 = sor.u32 %s130, %s131
      %s133 = ssub.s32 %s21, %s37
      %s134 = sor.u32 %s132, %s133
      %p135 = scmp.eq.s32.totalorder %s134, 0
      %s137 = sadd.s32 %s136, 1
      %s138 = scalar_select %p135, %s136, %s137
      %p141 = pneg %p135
      %p142 = scmp.eq.s32.totalorder %s12, 3
      %p143 = por %p141, %p142
      %p144 = scmp.ne.s32.totalorder %s136, %s139
      %p145 = scmp.eq.s32.totalorder %s12, 0
      %p146 = por %p144, %p145
      %p147 = scmp.ne.s32.totalorder %s136, %s139
      %p148 = scmp.eq.s32.totalorder %s17, 3
      %p149 = por %p147, %p148
      %p150 = scmp.ne.s32.totalorder %s139, %s140
      %p151 = scmp.eq.s32.totalorder %s17, 0
      %p152 = por %p150, %p151
      %p153 = scmp.ne.s32.totalorder %s139, %s140
      %p154 = scmp.eq.s32.totalorder %s18, 3
      %p155 = por %p153, %p154
      %p157 = scmp.ne.s32.totalorder %s140, %s156
      %p158 = scmp.eq.s32.totalorder %s18, 0
      %p159 = por %p157, %p158
      %p160 = scmp.le.s32.totalorder 1, %s12
      %p161 = scmp.lt.s32.totalorder %s12, 5
      %p162 = pnand %p160, %p161
      %p163 = pneg %p162
      // Predicated region
      $region9: #{complex_linear_pallas.1} parent=5 // pred_check
        _
      $region10: #{complex_linear_pallas.1} parent=5 // pred_check_branch
        %165 = sbr.rel (%p162) target = $region12
      $region11: #{complex_linear_pallas.1} parent=5 // pred_region
        %s166 = ssub.s32 %s12, 1
        // Predicated region
        $region13: #{complex_linear_pallas.1} parent=11 // pred_check
          %p167 = pneg %p122
        $region14: #{complex_linear_pallas.1} parent=11 // pred_check_branch
          %169 = sbr.rel (%p167) target = $region16
        $region15: #{complex_linear_pallas.1} parent=11 // pred_region
          %p170 = scmp.lt.s32.totalorder %s25, 0
          %s171 = scalar_select %p170, %s25, 0
          %s172 = scalar_lea.vmem %s2, %s171
        $region16: #{complex_linear_pallas.1} parent=11 // pred_fallthru
          _
      $region12: #{complex_linear_pallas.1} parent=5 // pred_fallthru
        _
      %p173 = scmp.lt.s32.totalorder %s12, 4
      // Predicated region
      $region17: #{complex_linear_pallas.1} parent=5 // pred_check
        %p174 = pneg %p173
      $region18: #{complex_linear_pallas.1} parent=5 // pred_check_branch
        %176 = sbr.rel (%p174) target = $region20
      $region19: #{complex_linear_pallas.1} parent=5 // pred_region
        // Predicated region
        $region21: #{complex_linear_pallas.1} parent=19 // pred_check
          %p177 = pneg %p62
        $region22: #{complex_linear_pallas.1} parent=19 // pred_check_branch
          %179 = sbr.rel (%p177) target = $region24
        $region23: #{complex_linear_pallas.1} parent=19 // pred_region
          %p180 = scmp.lt.s32.totalorder %s19, 1
          %s181 = scalar_select %p180, %s19, 1
          %p182 = scmp.lt.s32.totalorder %s22, 1
          %s183 = scalar_select %p182, %s22, 1
          %p184 = scmp.lt.s32.totalorder %s20, 0
          %s185 = scalar_select %p184, %s20, 0
          %s186 = sadd.s32 %s185, %s183
          %s187 = smul.addr %s181, 2
          %s188 = sadd.s32 %s186, %s187
          %s189 = smul.addr %s188, 4
          %s190 = scalar_lea.vmem %s0, %s189
        $region24: #{complex_linear_pallas.1} parent=19 // pred_fallthru
          _
        // Predicated region
        $region25: #{complex_linear_pallas.1} parent=19 // pred_check
          %p191 = pneg %p90
        $region26: #{complex_linear_pallas.1} parent=19 // pred_check_branch
          %193 = sbr.rel (%p191) target = $region28
        $region27: #{complex_linear_pallas.1} parent=19 // pred_region
          %p194 = scmp.lt.s32.totalorder %s22, 1
          %s195 = scalar_select %p194, %s22, 1
          %p196 = scmp.lt.s32.totalorder %s21, 0
          %s197 = scalar_select %p196, %s21, 0
          %s198 = smul.addr %s195, 4
          %s199 = sadd.s32 %s197, %s198
          %s200 = smul.addr %s199, 8
          %s201 = scalar_lea.vmem %s1, %s200
        $region28: #{complex_linear_pallas.1} parent=19 // pred_fallthru
          _
      $region20: #{complex_linear_pallas.1} parent=5 // pred_fallthru
        _
      %p202 = scmp.le.s32.totalorder 1, %s12
      %p203 = scmp.lt.s32.totalorder %s12, 5
      %p204 = pnand %p202, %p203
      %p205 = pneg %p204
      // Predicated region
      $region29: #{complex_linear_pallas.1} parent=5 // pred_check
        _
      $region30: #{complex_linear_pallas.1} parent=5 // pred_check_branch
        %207 = sbr.rel (%p204) target = $region32
      $region31: #{complex_linear_pallas.1} parent=5 // pred_region
        %s208 = ssub.s32 %s12, 1
        %p209 = scmp.lt.s32.totalorder %s23, 1
        %s210 = scalar_select %p209, %s23, 1
        %p211 = scmp.lt.s32.totalorder %s26, 1
        %s212 = scalar_select %p211, %s26, 1
        %p213 = scmp.lt.s32.totalorder %s24, 0
        %s214 = scalar_select %p213, %s24, 0
        %s215 = sadd.s32 %s214, %s212
        %s216 = smul.addr %s210, 2
        %s217 = sadd.s32 %s215, %s216
        %s218 = smul.addr %s217, 4
        %s219 = scalar_lea.vmem %s0, %s218
        %p220 = pneg %p68
        %p221 = pneg %p65
        %p222 = scmp.lt.s32.totalorder %s26, 1
        %s223 = scalar_select %p222, %s26, 1
        %p224 = scmp.lt.s32.totalorder %s25, 0
        %s225 = scalar_select %p224, %s25, 0
        %s226 = smul.addr %s223, 4
        %s227 = sadd.s32 %s225, %s226
        %s228 = smul.addr %s227, 8
        %s229 = scalar_lea.vmem %s1, %s228
        %p230 = pneg %p96
        %p231 = pneg %p93
        %p232 = scmp.lt.s32.totalorder %s25, 0
        %s233 = scalar_select %p232, %s25, 0
        %s234 = scalar_lea.vmem %s2, %s233
        %p235 = pneg %p122
        %p236 = pneg %p119
        %p237 = pneg %p152
        %p238 = pneg %p149
        %s239 = sand.u32 %s139, 1
        %s240 = scalar_lea.sflag [#allocation4], %s239
        %s241 = sand.u32 %s139, 1
        %s242 = smul.addr %s241, 4
        %s243 = scalar_lea.vmem [#allocation3], %s242
        %p244 = scmp.lt.s32.totalorder %s23, 1
        %s245 = scalar_select %p244, %s23, 1
        %p246 = scmp.lt.s32.totalorder %s26, 1
        %s247 = scalar_select %p246, %s26, 1
        %p248 = scmp.lt.s32.totalorder %s24, 0
        %s249 = scalar_select %p248, %s24, 0
        %s250 = sadd.s32 %s249, %s247
        %s251 = smul.addr %s245, 2
        %s252 = sadd.s32 %s250, %s251
        %s253 = smul.addr %s252, 4
        %s254 = scalar_lea.vmem %s0, %s253
        %p255 = scmp.lt.s32.totalorder %s26, 1
        %s256 = scalar_select %p255, %s26, 1
        %p257 = scmp.lt.s32.totalorder %s25, 0
        %s258 = scalar_select %p257, %s25, 0
        %s259 = smul.addr %s256, 4
        %s260 = sadd.s32 %s258, %s259
        %s261 = smul.addr %s260, 8
        %s262 = scalar_lea.vmem %s1, %s261
        %p263 = scmp.lt.s32.totalorder %s25, 0
        %s264 = scalar_select %p263, %s25, 0
        %s265 = scalar_lea.vmem %s2, %s264
        %p266 = scmp.eq.s32.totalorder %s26, 0
        // Predicated region
        $region33: #{complex_linear_pallas.1} parent=31 // pred_check
          %p267 = pneg %p266
        $region34: #{complex_linear_pallas.1} parent=31 // pred_check_branch
          %269 = sbr.rel (%p267) target = $region36
        $region35: #{complex_linear_pallas.1} parent=31 // pred_region
          %vm270 = vcmask 519168
          %271 = vst.msk [vmem:[#allocation2] sm:$0xf] %vm270, 0.0
        $region36: #{complex_linear_pallas.1} parent=31 // pred_fallthru
          _
        %v272 = vld [vmem:[#allocation2] sm:$0xf]
        %v273 = vld [vmem:[%s254] sm:$0xf]
        %v274 = vld [vmem:[%s262] sm:$0xff]
        %v275 = vld [vmem:[%s262 + $0x8] sm:$0xff]
        %v276 = vld [vmem:[%s262 + $0x10] sm:$0xff]
        %v277 = vld [vmem:[%s262 + $0x18] sm:$0xff]
        %vm278 = vcmask 261120
        %v280 = vsel %vm278, %v273, 0
        %282 = vmatprep.subr.mxu0 0.0
        %283 = vmatpush1.msra.mxu0 %v274
        %284 = vmatprep.subr.mxu0 0.0
        %285 = vmatpush1.msra.mxu0 %v275
        %286 = vmatprep.subr.mxu0 0.0
        %287 = vmatpush1.msra.mxu0 %v276
        %288 = vmatprep.subr.mxu0 0.0
        %289 = vmatpush1.msra.mxu0 %v277
        %290 = vmatprep.subr.mxu0 0.0
        %291 = vmatpush1.msra.mxu0 0.0
        %292 = vmatprep.subr.mxu0 0.0
        %293 = vmatpush1.msra.mxu0 0.0
        %294 = vmatprep.subr.mxu0 0.0
        %295 = vmatpush1.msra.mxu0 0.0
        %296 = vmatprep.subr.mxu0 0.0
        %297 = vmatpush1.msra.mxu0 0.0
        %298 = vmatprep.subr.mxu0 0.0
        %299 = vmatpush1.msra.mxu0 0.0
        %300 = vmatprep.subr.mxu0 0.0
        %301 = vmatpush1.msra.mxu0 0.0
        %302 = vmatprep.subr.mxu0 0.0
        %303 = vmatpush1.msra.mxu0 0.0
        %304 = vmatprep.subr.mxu0 0.0
        %305 = vmatpush1.msra.mxu0 0.0
        %306 = vmatprep.subr.mxu0 0.0
        %307 = vmatpush1.msra.mxu0 0.0
        %308 = vmatprep.subr.mxu0 0.0
        %309 = vmatpush1.msra.mxu0 0.0
        %310 = vmatprep.subr.mxu0 0.0
        %311 = vmatpush1.msra.mxu0 0.0
        %312 = vmatprep.subr.mxu0 0.0
        %313 = vmatpush1.msra.mxu0 0.0
        %314 = vmatprep.subr.mxu0 0.0
        %315 = vmatpush1.msra.mxu0 0.0
        %316 = vmatprep.subr.mxu0 0.0
        %317 = vmatpush1.msra.mxu0 0.0
        %318 = vmatprep.subr.mxu0 0.0
        %319 = vmatpush1.msra.mxu0 0.0
        %320 = vmatprep.subr.mxu0 0.0
        %321 = vmatpush1.msra.mxu0 0.0
        %322 = vmatprep.subr.mxu0 0.0
        %323 = vmatpush1.msra.mxu0 0.0
        %324 = vmatprep.subr.mxu0 0.0
        %325 = vmatpush1.msra.mxu0 0.0
        %326 = vmatprep.subr.mxu0 0.0
        %327 = vmatpush1.msra.mxu0 0.0
        %328 = vmatprep.subr.mxu0 0.0
        %329 = vmatpush1.msra.mxu0 0.0
        %330 = vmatprep.subr.mxu0 0.0
        %331 = vmatpush1.msra.mxu0 0.0
        %332 = vmatprep.subr.mxu0 0.0
        %333 = vmatpush1.msra.mxu0 0.0
        %334 = vmatprep.subr.mxu0 0.0
        %335 = vmatpush1.msra.mxu0 0.0
        %336 = vmatprep.subr.mxu0 0.0
        %337 = vmatpush1.msra.mxu0 0.0
        %338 = vmatprep.subr.mxu0 0.0
        %339 = vmatpush1.msra.mxu0 0.0
        %340 = vmatprep.subr.mxu0 0.0
        %341 = vmatpush1.msra.mxu0 0.0
        %342 = vmatprep.subr.mxu0 0.0
        %343 = vmatpush1.msra.mxu0 0.0
        %344 = vmatprep.subr.mxu0 0.0
        %345 = vmatpush1.msra.mxu0 0.0
        %346 = vmatprep.mubr.f32.mxu0 0.0
        %347 = vmatmul.mubr.f32.gmra.mrb[0].mxu0 %v280
        %v348 = vpop.f32.mrb[0].mxu0
        %v349 = vadd.f32 0.0, %v348
        %v350 = vpop.f32.mrb[0].mxu0
        %351 = vdwg.mxu0
        %v352 = vadd.f32 %v272, %v349
        %vm353 = vcmask 519168
        %354 = vst.msk [vmem:[#allocation2] sm:$0xf] %vm353, %v352
        %p355 = scmp.eq.s32.totalorder %s26, 1
        // Predicated region
        $region37: #{complex_linear_pallas.1} parent=31 // pred_check
          %p356 = pneg %p355
        $region38: #{complex_linear_pallas.1} parent=31 // pred_check_branch
          %358 = sbr.rel (%p356) target = $region40
        $region39: #{complex_linear_pallas.1} parent=31 // pred_region
          %v359 = vld [vmem:[#allocation2] sm:$0xf]
          %v360 = vld [vmem:[%s265] sm:$0x1]
          %v362 = vlaneseq
          %v363 = vshrl.u32 %v362, 7
          %v364 = vsub.s32 0, %v363
          %v365 = vrot.slane %v360, %v364
          %v367 = vadd.f32 %v359, %v365
          %368 = vst.msk [vmem:[%s243] sm:$0xf] %vm353, %v367
        $region40: #{complex_linear_pallas.1} parent=31 // pred_fallthru
          _
        %s369 = sand.u32 %s139, 1
        %s370 = scalar_lea.sflag [#allocation4], %s369
        %s371 = sand.u32 %s139, 1
        %s372 = smul.addr %s371, 4
        %s373 = scalar_lea.vmem [#allocation3], %s372
        // Predicated region
        $region41: #{complex_linear_pallas.1} parent=31 // pred_check
          %p374 = pneg %p149
        $region42: #{complex_linear_pallas.1} parent=31 // pred_check_branch
          %376 = sbr.rel (%p374) target = $region44
        $region43: #{complex_linear_pallas.1} parent=31 // pred_region
          %s378 = ssub.s32 64, 64
          %379 = vsyncadd %s370, %s378
          %s380 = sadd.s32 %s25, %s24
          %s381 = sadd.s32 %s380, %s23
          %s382 = smul.addr %s381, 64
          %s383 = scalar_lea.hbm %s3, %s382
          %s385 = sshll.u32 %s373, 4
          %s386 = int_to_ptr.vmem [resolvable:$true] %s385
          %388 = dma.vmem_to_hbm [thread:$0]  %s386, 64, %s383, %s370
        $region44: #{complex_linear_pallas.1} parent=31 // pred_fallthru
          _
      $region32: #{complex_linear_pallas.1} parent=5 // pred_fallthru
        _
      %p389 = scmp.le.s32.totalorder 2, %s12
      // Predicated region
      $region45: #{complex_linear_pallas.1} parent=5 // pred_check
        %p390 = pneg %p389
      $region46: #{complex_linear_pallas.1} parent=5 // pred_check_branch
        %392 = sbr.rel (%p390) target = $region48
      $region47: #{complex_linear_pallas.1} parent=5 // pred_region
        %s393 = ssub.s32 %s12, 2
        // Predicated region
        $region49: #{complex_linear_pallas.1} parent=47 // pred_check
          %p394 = pneg %p155
        $region50: #{complex_linear_pallas.1} parent=47 // pred_check_branch
          %396 = sbr.rel (%p394) target = $region52
        $region51: #{complex_linear_pallas.1} parent=47 // pred_region
          %s397 = sand.u32 %s140, 1
          %s398 = scalar_lea.sflag [#allocation4], %s397
          %s399 = sand.u32 %s140, 1
          %s400 = smul.addr %s399, 4
          %s401 = scalar_lea.vmem [#allocation3], %s400
          %402 = dma.done %s398, 64
        $region52: #{complex_linear_pallas.1} parent=47 // pred_fallthru
          _
      $region48: #{complex_linear_pallas.1} parent=5 // pred_fallthru
        _
    $region6: #{complex_linear_pallas.1} parent=1 // loop_footer
      %s16 = sadd.s32 1, %s12
    $region7: #{complex_linear_pallas.1} parent=1 // loop_footer_branch
      %11 = sbr.rel target = $region3
    $region8: #{complex_linear_pallas.1} parent=1 // loop_exit
      _
    %403 = vsyncpa [#allocation4], 1
    %s404 = scalar_lea.sflag [#allocation4], 1
    %405 = vsyncpa %s404, 1

</llo_original>
